<compile_context>
chip_gen: v7x
topology: tpu7x:2x2x1
jax: 0.10.0
libtpu: 0.0.40
codegen_flags: <defaults>
</compile_context>

<pallas_src>
import functools

import jax
import jax.numpy as jnp
from jax.experimental import pallas as pl
from jax.experimental.pallas import tpu as pltpu


# ---------------------------------------------------------------------------
# Fast path: lane-dense (B, H, W*C) layout, both rolls on the XLU.
# ---------------------------------------------------------------------------
def _roll_kernel(x_ref, o_ref, *, sub_shift, lane_shift):
    """Single load -> sublane roll (H) -> lane roll (W*C) -> single store."""
    x = x_ref[...]                                   # (H, W*C)
    if sub_shift:
        x = pltpu.roll(x, shift=sub_shift, axis=0)   # H roll (sublane, XLU)
    if lane_shift:
        x = pltpu.roll(x, shift=lane_shift, axis=1)  # W roll (lane, XLU)
    o_ref[...] = x


def _cyclic_shift_fast(x, dh, dw):
    B, H, W, C = x.shape
    WC = W * C
    lane_shift = dw * C                  # roll of W by dw == roll of W*C by dw*C
    itemsize = jnp.dtype(x.dtype).itemsize
    x2 = x.reshape(B, H, WC)             # lane-dense last axis (metadata only)

    # Double-buffered input + output tiles must fit the scoped VMEM limit.
    block_bytes = H * WC * itemsize
    need = 4 * block_bytes + (1 << 20)
    compiler_kwargs = dict(dimension_semantics=("parallel",))
    if need > (16 << 20):                # above the smallest (v5e) default
        compiler_kwargs["vmem_limit_bytes"] = min(need, 100 << 20)

    out2 = pl.pallas_call(
        functools.partial(_roll_kernel, sub_shift=dh, lane_shift=lane_shift),
        out_shape=jax.ShapeDtypeStruct((B, H, WC), x.dtype),
        grid_spec=pltpu.PrefetchScalarGridSpec(
            num_scalar_prefetch=0,
            grid=(B,),
            in_specs=[pl.BlockSpec((None, H, WC), lambda b: (b, 0, 0))],
            out_specs=pl.BlockSpec((None, H, WC), lambda b: (b, 0, 0)),
        ),
        compiler_params=pltpu.CompilerParams(**compiler_kwargs),
        cost_estimate=pl.CostEstimate(
            flops=0, transcendentals=0,
            bytes_accessed=2 * x.size * itemsize),
    )(x2)
    return out2.reshape(B, H, W, C)


# ---------------------------------------------------------------------------
# Fallback path (unaligned shapes / packed dtypes): known-good concatenate
# formulation.  Only used when the lane-dense fast path does not apply.
# ---------------------------------------------------------------------------
def _concat_kernel(x_ref, o_ref, *, dh, dw):
    x = x_ref[...]                       # (1, H, W, C)
    H, W = x.shape[1], x.shape[2]
    if dh:
        x = jnp.concatenate([x[:, H - dh:, :, :], x[:, :H - dh, :, :]], axis=1)
    if dw:
        x = jnp.concatenate([x[:, :, W - dw:, :], x[:, :, :W - dw, :]], axis=2)
    o_ref[...] = x


def _cyclic_shift_fallback(x, dh, dw):
    B, H, W, C = x.shape
    itemsize = jnp.dtype(x.dtype).itemsize
    return pl.pallas_call(
        functools.partial(_concat_kernel, dh=dh, dw=dw),
        out_shape=jax.ShapeDtypeStruct((B, H, W, C), x.dtype),
        grid_spec=pltpu.PrefetchScalarGridSpec(
            num_scalar_prefetch=0,
            grid=(B,),
            in_specs=[pl.BlockSpec((1, H, W, C), lambda b: (b, 0, 0, 0))],
            out_specs=pl.BlockSpec((1, H, W, C), lambda b: (b, 0, 0, 0)),
        ),
        compiler_params=pltpu.CompilerParams(dimension_semantics=("parallel",)),
        cost_estimate=pl.CostEstimate(
            flops=0, transcendentals=0,
            bytes_accessed=2 * x.size * itemsize),
    )(x)


# ---------------------------------------------------------------------------
# Public wrapper (== CyclicShift(displacement)(x) for x of shape (B, H, W, C)).
# `displacement` must be a static Python int (it is baked into the kernel).
# ---------------------------------------------------------------------------
def cyclic_shift(x, displacement):
    if x.ndim != 4:
        raise ValueError("expected (B, H, W, C) input")
    B, H, W, C = x.shape
    dh = displacement % H                # torch.roll semantics, handles negatives
    dw = displacement % W
    if dh == 0 and dw == 0:
        return x

    itemsize = jnp.dtype(x.dtype).itemsize
    # Fast path needs an aligned tile after flattening: H a multiple of the
    # f32 sublane tile (8) and W*C a multiple of 128 lanes.
    fast_ok = (itemsize == 4) and (H % 8 == 0) and ((W * C) % 128 == 0)
    if fast_ok:
        return _cyclic_shift_fast(x, dh, dw)
    return _cyclic_shift_fallback(x, dh, dw)


if __name__ == "__main__":
    key = jax.random.PRNGKey(0)

    # Small Swin-like shape, lane-dense after flattening: W*C = 16*8 = 128.
    x = jax.random.normal(key, (2, 16, 16, 8), dtype=jnp.float32)
    for disp in (3, -5):
        out = jax.block_until_ready(cyclic_shift(x, disp))
        ref = jnp.roll(x, shift=(disp, disp), axis=(1, 2))
        assert out.shape == x.shape and out.dtype == x.dtype
        assert jnp.array_equal(out, ref), f"fast-path mismatch (disp={disp})"

    # Non-lane-aligned channels (C=4 -> W*C=64) exercise the fallback path.
    x_small_c = jax.random.normal(key, (2, 16, 16, 4), dtype=jnp.float32)
    out = jax.block_until_ready(cyclic_shift(x_small_c, 3))
    ref = jnp.roll(x_small_c, shift=(3, 3), axis=(1, 2))
    assert jnp.array_equal(out, ref), "fallback mismatch"

    print("KERNEL_OK")
</pallas_src>

<mosaic_0001>
module attributes {stable_mosaic.version = 11 : i64} {
  func.func @_roll_kernel(%arg0: i32, %arg1: memref<1x16x128xf32, #tpu.memory_space<vmem>>, %arg2: memref<1x16x128xf32, #tpu.memory_space<vmem>>) attributes {dimension_semantics = [#tpu.dimension_semantics<parallel>], iteration_bounds = array<i64: 2>, scalar_prefetch = 0 : i64, scratch_operands = 0 : i64, tpu.core_type = #tpu.core_type<tc>, window_params = [{transform_indices = @transform_0, window_bounds = array<i64: 1, 16, 128>}, {transform_indices = @transform_1, window_bounds = array<i64: 1, 16, 128>}]} {
    %c0 = arith.constant 0 : index
    %c0_0 = arith.constant 0 : index
    %c0_1 = arith.constant 0 : index
    %0 = vector.load %arg1[%c0, %c0_0, %c0_1] : memref<1x16x128xf32, #tpu.memory_space<vmem>>, vector<1x16x128xf32>
    %1 = vector.shape_cast %0 : vector<1x16x128xf32> to vector<16x128xf32>
    %c3_i32 = arith.constant 3 : i32
    %2 = tpu.dynamic_rotate %1 by %c3_i32 dim 0 : vector<16x128xf32>, i32 -> vector<16x128xf32>
    %c24_i32 = arith.constant 24 : i32
    %3 = tpu.dynamic_rotate %2 by %c24_i32 dim 1 : vector<16x128xf32>, i32 -> vector<16x128xf32>
    %c0_2 = arith.constant 0 : index
    %c0_3 = arith.constant 0 : index
    %c0_4 = arith.constant 0 : index
    %4 = vector.load %arg2[%c0_2, %c0_3, %c0_4] : memref<1x16x128xf32, #tpu.memory_space<vmem>>, vector<1x16x128xf32>
    %5 = vector.shape_cast %4 : vector<1x16x128xf32> to vector<16x128xf32>
    %6 = vector.shape_cast %3 : vector<16x128xf32> to vector<1x16x128xf32>
    tpu.vector_store %arg2[%c0_2, %c0_3, %c0_4], %6 {strides = array<i32>} : memref<1x16x128xf32, #tpu.memory_space<vmem>>, vector<1x16x128xf32>,
    return
  }
  func.func @transform_0(%arg0: i32) -> (i32, i32, i32) {
    %c0_i32 = arith.constant 0 : i32
    %c0_i32_0 = arith.constant 0 : i32
    %c0_i32_1 = arith.constant 0 : i32
    return %arg0, %c0_i32, %c0_i32_0 : i32, i32, i32
  }
  func.func @transform_1(%arg0: i32) -> (i32, i32, i32) {
    %c0_i32 = arith.constant 0 : i32
    %c0_i32_0 = arith.constant 0 : i32
    %c0_i32_1 = arith.constant 0 : i32
    return %arg0, %c0_i32, %c0_i32_0 : i32, i32, i32
  }
}

</mosaic_0001>

<llo_original>
// kernel: tpu_custom_call.1
$region0: #{tpu_custom_call.1}
  #allocation0 [shape = 'u32[]', space=smem, size = 0x4, offset = 0x4, fixed_abs, tag = 'smem constant byte address 0x4 - core index']
  #allocation1 [shape = 'u32[144,128]{1,0:T(1,128)}', space=vmem, size = 0x12000, scoped, tag = 'internal scratch']
  %s0 = inlined_call_operand.hbm [shape: f32[2,16,128], index: 0, kind: input, shape index: {}]
  %s1 = inlined_call_operand.hbm [shape: f32[2,16,128], index: 1, kind: output, shape index: {}]
  %s2 = sld [smem:[#allocation0]]
  $region41: #{tpu_custom_call.1} parent=0
    _
  %s4 = ssub.s32 1, %s2
  %s5 = scalar_select 0, %s4, %s2
  $region1: #{tpu_custom_call.1} parent=0
    #allocation2 [shape = 'u8[16384]{0}', space=vmem, size = 0x4000, scoped, tag = 'input window, operand 0']
    #allocation3 [shape = 's32[2]{0}', space=sflag, size = 0x8, scoped, tag = 'scoped memory for tpu_custom_call.1']
    #allocation4 [shape = 's32[2]{0}', space=sflag, size = 0x8, scoped, tag = 'scoped memory for tpu_custom_call.1']
    #allocation5 [shape = 'u8[16384]{0}', space=vmem, size = 0x4000, scoped, tag = 'output window, operand 0']
    %6 = vsyncpa [#allocation3], 0
    %s7 = scalar_lea.sflag [#allocation3], 1
    %8 = vsyncpa %s7, 0
    %9 = vsyncpa [#allocation4], 0
    %s10 = scalar_lea.sflag [#allocation4], 1
    %11 = vsyncpa %s10, 0
    loop: start=0, step=1, limit=4
    $region2: #{tpu_custom_call.1} parent=1 // loop_pre_header
      _
    $region3: #{tpu_custom_call.1} parent=1 // loop_header
      %s13 = sphi 0, %s17
      %p14 = scmp.ge.s32.totalorder %s13, 4
      %s23 = sphi 0, %s25
      %s26 = sphi 0, %s23
      %s27 = sphi 0, %s26
      %s43 = sphi 0, %s27
      %s49 = sphi 0, %s51
      %s52 = sphi 0, %s49
      %s53 = sphi 0, %s52
      %s69 = sphi 0, %s53
    $region4: #{tpu_custom_call.1} parent=1 // loop_header_branch
      %16 = sbr.rel (%p14) target = $region8
    $region5: #{tpu_custom_call.1} parent=1 // loop_body
      %s18 = ssub.s32 %s13, 1
      %s19 = ssub.s32 %s13, 2
      %s20 = sadd.s32 %s13, 1
      %s21 = ssub.s32 %s13, %s20
      %p22 = scmp.eq.s32.totalorder %s21, 0
      %s24 = sadd.s32 %s23, 1
      %s25 = scalar_select %p22, %s23, %s24
      %p28 = pneg %p22
      %p29 = scmp.eq.s32.totalorder %s13, 1
      %p30 = por %p28, %p29
      %p31 = scmp.ne.s32.totalorder %s23, %s26
      %p32 = scmp.eq.s32.totalorder %s13, 0
      %p33 = por %p31, %p32
      %p34 = scmp.ne.s32.totalorder %s23, %s26
      %p35 = scmp.eq.s32.totalorder %s18, 1
      %p36 = por %p34, %p35
      %p37 = scmp.ne.s32.totalorder %s26, %s27
      %p38 = scmp.eq.s32.totalorder %s18, 0
      %p39 = por %p37, %p38
      %p40 = scmp.ne.s32.totalorder %s26, %s27
      %p41 = scmp.eq.s32.totalorder %s19, 1
      %p42 = por %p40, %p41
      %p44 = scmp.ne.s32.totalorder %s27, %s43
      %p45 = scmp.eq.s32.totalorder %s19, 0
      %p46 = por %p44, %p45
      %s47 = ssub.s32 %s13, %s20
      %p48 = scmp.eq.s32.totalorder %s47, 0
      %s50 = sadd.s32 %s49, 1
      %s51 = scalar_select %p48, %s49, %s50
      %p54 = pneg %p48
      %p55 = scmp.eq.s32.totalorder %s13, 1
      %p56 = por %p54, %p55
      %p57 = scmp.ne.s32.totalorder %s49, %s52
      %p58 = scmp.eq.s32.totalorder %s13, 0
      %p59 = por %p57, %p58
      %p60 = scmp.ne.s32.totalorder %s49, %s52
      %p61 = scmp.eq.s32.totalorder %s18, 1
      %p62 = por %p60, %p61
      %p63 = scmp.ne.s32.totalorder %s52, %s53
      %p64 = scmp.eq.s32.totalorder %s18, 0
      %p65 = por %p63, %p64
      %p66 = scmp.ne.s32.totalorder %s52, %s53
      %p67 = scmp.eq.s32.totalorder %s19, 1
      %p68 = por %p66, %p67
      %p70 = scmp.ne.s32.totalorder %s53, %s69
      %p71 = scmp.eq.s32.totalorder %s19, 0
      %p72 = por %p70, %p71
      %p73 = scmp.le.s32.totalorder 1, %s13
      %p74 = scmp.lt.s32.totalorder %s13, 3
      %p75 = pnand %p73, %p74
      %p76 = pneg %p75
      // Predicated region
      $region9: #{tpu_custom_call.1} parent=5 // pred_check
        _
      $region10: #{tpu_custom_call.1} parent=5 // pred_check_branch
        %78 = sbr.rel (%p75) target = $region12
      $region11: #{tpu_custom_call.1} parent=5 // pred_region
        %s79 = ssub.s32 %s13, 1
      $region12: #{tpu_custom_call.1} parent=5 // pred_fallthru
        _
      %p80 = scmp.lt.s32.totalorder %s13, 2
      // Predicated region
      $region13: #{tpu_custom_call.1} parent=5 // pred_check
        %p81 = pneg %p80
      $region14: #{tpu_custom_call.1} parent=5 // pred_check_branch
        %83 = sbr.rel (%p81) target = $region16
      $region15: #{tpu_custom_call.1} parent=5 // pred_region
        // Predicated region
        $region17: #{tpu_custom_call.1} parent=15 // pred_check
          %p84 = pneg %p33
        $region18: #{tpu_custom_call.1} parent=15 // pred_check_branch
          %86 = sbr.rel (%p84) target = $region20
        $region19: #{tpu_custom_call.1} parent=15 // pred_region
          %s87 = sand.u32 %s23, 1
          %s88 = scalar_lea.sflag [#allocation3], %s87
          %s89 = sand.u32 %s23, 1
          %s90 = smul.addr %s89, 16
          %s91 = scalar_lea.vmem [#allocation2], %s90
          %s93 = ssub.s32 256, 256
          %94 = vsyncadd %s88, %s93
          %s95 = smul.addr %s13, 2
          %s96 = smul.addr %s95, 128
          %s97 = scalar_lea.hbm %s0, %s96
          %s98 = sshll.u32 %s91, 4
          %s99 = int_to_ptr.vmem [resolvable:$true] %s98
          %104 = dma.hbm_to_vmem [thread:$0]  %s97, 256, %s99, %s88, 128, 128, 8
        $region20: #{tpu_custom_call.1} parent=15 // pred_fallthru
          _
      $region16: #{tpu_custom_call.1} parent=5 // pred_fallthru
        _
      %p105 = scmp.le.s32.totalorder 1, %s13
      %p106 = scmp.lt.s32.totalorder %s13, 3
      %p107 = pnand %p105, %p106
      %p108 = pneg %p107
      // Predicated region
      $region21: #{tpu_custom_call.1} parent=5 // pred_check
        _
      $region22: #{tpu_custom_call.1} parent=5 // pred_check_branch
        %110 = sbr.rel (%p107) target = $region24
      $region23: #{tpu_custom_call.1} parent=5 // pred_region
        %s111 = ssub.s32 %s13, 1
        %s112 = sand.u32 %s26, 1
        %s113 = scalar_lea.sflag [#allocation3], %s112
        %s114 = sand.u32 %s26, 1
        %s115 = smul.addr %s114, 16
        %s116 = scalar_lea.vmem [#allocation2], %s115
        // Predicated region
        $region25: #{tpu_custom_call.1} parent=23 // pred_check
          %p117 = pneg %p39
        $region26: #{tpu_custom_call.1} parent=23 // pred_check_branch
          %119 = sbr.rel (%p117) target = $region28
        $region27: #{tpu_custom_call.1} parent=23 // pred_region
          %120 = dma.done %s113, 256
        $region28: #{tpu_custom_call.1} parent=23 // pred_fallthru
          _
        %s121 = sand.u32 %s26, 1
        %s122 = scalar_lea.sflag [#allocation3], %s121
        %s123 = sand.u32 %s26, 1
        %s124 = smul.addr %s123, 16
        %s125 = scalar_lea.vmem [#allocation2], %s124
        %p126 = pneg %p39
        %p127 = pneg %p36
        %p128 = pneg %p65
        %p129 = pneg %p62
        %s130 = sand.u32 %s52, 1
        %s131 = scalar_lea.sflag [#allocation4], %s130
        %s132 = sand.u32 %s52, 1
        %s133 = smul.addr %s132, 16
        %s134 = scalar_lea.vmem [#allocation5], %s133
        %v135 = vld [vmem:[%s116] sm:$0xff]
        %v136 = vld [vmem:[%s116 + $0x8] sm:$0xff]
        %v137 = vrot.slane %v135, 5
        %v138 = vrot.slane %v136, 5
        %v139 = vlaneseq
        %v140 = vshrl.u32 %v139, 7
        %vm141 = vcmp.lt.s32.totalorder %v140, 3
        %v142 = vsel %vm141, %v137, %v138
        %v143 = vsel %vm141, %v138, %v137
        %144 = vrot.lane.b32.xlu0 %v143, 24
        %v145 = vpop.permute.xlu0 %144
        %146 = vrot.lane.b32.xlu0 %v142, 24
        %v147 = vpop.permute.xlu0 %146
        %148 = vst [vmem:[%s134] sm:$0xff] %v145
        %149 = vst [vmem:[%s134 + $0x8] sm:$0xff] %v147
        %s150 = sand.u32 %s52, 1
        %s151 = scalar_lea.sflag [#allocation4], %s150
        %s152 = sand.u32 %s52, 1
        %s153 = smul.addr %s152, 16
        %s154 = scalar_lea.vmem [#allocation5], %s153
        // Predicated region
        $region29: #{tpu_custom_call.1} parent=23 // pred_check
          %p155 = pneg %p62
        $region30: #{tpu_custom_call.1} parent=23 // pred_check_branch
          %157 = sbr.rel (%p155) target = $region32
        $region31: #{tpu_custom_call.1} parent=23 // pred_region
          %s159 = ssub.s32 256, 256
          %160 = vsyncadd %s151, %s159
          %s161 = smul.addr %s18, 2
          %s162 = smul.addr %s161, 128
          %s163 = scalar_lea.hbm %s1, %s162
          %s164 = sshll.u32 %s154, 4
          %s165 = int_to_ptr.vmem [resolvable:$true] %s164
          %170 = dma.vmem_to_hbm [thread:$0]  %s165, 256, %s163, %s151, 128, 128, 8
        $region32: #{tpu_custom_call.1} parent=23 // pred_fallthru
          _
      $region24: #{tpu_custom_call.1} parent=5 // pred_fallthru
        _
      %p171 = scmp.le.s32.totalorder 2, %s13
      // Predicated region
      $region33: #{tpu_custom_call.1} parent=5 // pred_check
        %p172 = pneg %p171
      $region34: #{tpu_custom_call.1} parent=5 // pred_check_branch
        %174 = sbr.rel (%p172) target = $region36
      $region35: #{tpu_custom_call.1} parent=5 // pred_region
        %s175 = ssub.s32 %s13, 2
        // Predicated region
        $region37: #{tpu_custom_call.1} parent=35 // pred_check
          %p176 = pneg %p68
        $region38: #{tpu_custom_call.1} parent=35 // pred_check_branch
          %178 = sbr.rel (%p176) target = $region40
        $region39: #{tpu_custom_call.1} parent=35 // pred_region
          %s179 = sand.u32 %s53, 1
          %s180 = scalar_lea.sflag [#allocation4], %s179
          %s181 = sand.u32 %s53, 1
          %s182 = smul.addr %s181, 16
          %s183 = scalar_lea.vmem [#allocation5], %s182
          %184 = dma.done %s180, 256
        $region40: #{tpu_custom_call.1} parent=35 // pred_fallthru
          _
      $region36: #{tpu_custom_call.1} parent=5 // pred_fallthru
        _
    $region6: #{tpu_custom_call.1} parent=1 // loop_footer
      %s17 = sadd.s32 1, %s13
    $region7: #{tpu_custom_call.1} parent=1 // loop_footer_branch
      %12 = sbr.rel target = $region3
    $region8: #{tpu_custom_call.1} parent=1 // loop_exit
      _
    %185 = vsyncpa [#allocation3], 1
    %s186 = scalar_lea.sflag [#allocation3], 1
    %187 = vsyncpa %s186, 1
    %188 = vsyncpa [#allocation4], 1
    %s189 = scalar_lea.sflag [#allocation4], 1
    %190 = vsyncpa %s189, 1

</llo_original>
